<compile_context>
chip_gen: v7x
topology: tpu7x:2x2x1
jax: 0.10.0
libtpu: 0.0.40
codegen_flags: <defaults>
</compile_context>

<pallas_src>
import jax
import jax.numpy as jnp
import numpy as np
from jax.experimental import pallas as pl
from jax.experimental.pallas import tpu as pltpu

SMOOTH = 1e-8
_LANES = 128
_TILE_BYTES = 4 << 20        # target upper bound per input HBM block (review: 2-4 MiB)
_TMP_TILES_F32 = 24          # conservative allowance for in-kernel f32 temporaries


def _round_up(x, m):
    return ((x + m - 1) // m) * m


def _sublane_step(dtype):
    # minimum second-minor tile multiple: 8 (4-byte), 16 (2-byte), 32 (1-byte)
    return max(8, 32 // jnp.dtype(dtype).itemsize)


def _vmem_capacity_bytes():
    try:
        return int(pltpu.get_tpu_info().vmem_capacity_bytes)
    except Exception:
        return 64 << 20          # conservative (v7x-sized) fallback


def _num_tensorcores():
    # Best effort: chips exposing 2 TensorCores behind one JAX device.
    try:
        kind = jax.devices()[0].device_kind.lower().replace(" ", "")
        if any(tag in kind for tag in ("v7", "tpu7", "v4", "v5p")):
            return 2
    except Exception:
        pass
    return 1


def _make_stats_kernel(tt, tps, hw, needs_mask):
    def kernel(pred_ref, gt_ref, out_ref):
        # out_ref: resident (8, 128) f32 accumulator per (split, channel) block,
        # accumulated across the (n, pixel-tile) grid axes.
        @pl.when(jnp.logical_and(pl.program_id(2) == 0, pl.program_id(3) == 0))
        def _():
            out_ref[...] = jnp.zeros_like(out_ref)

        p = pred_ref[...].astype(jnp.float32)       # (tt, 128)
        g = gt_ref[...].astype(jnp.float32)         # (tt, 128)
        sig = jax.nn.sigmoid(p)
        t = jnp.tanh(p)

        if needs_mask:
            # Invalidate wrapper zero-padding, Pallas tail-tile padding rows and
            # dead tiles introduced by the 2-way core split.
            tile = pl.program_id(0) * tps + pl.program_id(3)   # un-clamped tile index
            row = jax.lax.broadcasted_iota(jnp.int32, (tt, _LANES), 0)
            lane = jax.lax.broadcasted_iota(jnp.int32, (tt, _LANES), 1)
            valid = (tile * (tt * _LANES) + row * _LANES + lane) < hw
            sig = jnp.where(valid, sig, 0.0)
            t = jnp.where(valid, t, 0.0)
            g = jnp.where(valid, g, 0.0)

        def srow(x):                                # sublane-only reduce -> (1, 128)
            return jnp.sum(x, axis=0, keepdims=True)

        relu_t = jnp.maximum(t, 0.0)
        relu_g = jnp.maximum(g, 0.0)

        out_ref[0:1, :] += srow(sig)                        # sum(sigmoid(p))
        out_ref[1:2, :] += srow(g)                          # sum(g)
        out_ref[2:3, :] += srow(jnp.abs(sig - g))           # sum(|sigmoid(p)-g|)
        out_ref[3:4, :] += srow(t)                          # sum(tanh(p))
        out_ref[4:5, :] += srow(jnp.abs(t))                 # sum(|tanh(p)|)
        out_ref[5:6, :] += srow(jnp.maximum(-g, 0.0))       # sum(relu(-g)); 0 iff min(g)>=0
        out_ref[6:7, :] += srow(jnp.abs(t - g))             # sum(|tanh(p)-g|)
        out_ref[7:8, :] += srow(jnp.abs(relu_t - relu_g))   # fg norm-diff

    return kernel


def soft_jaccard_loss(pred, gt, *, loss_type=1, secondary_weight=1.0,
                      tile_bytes=_TILE_BYTES, _force_split=False):
    """pred: (N, C, H, W); gt: (N, C+1, H, W). Mirrors SoftJaccardLoss.forward."""
    if loss_type not in (1, 2):
        raise ValueError("Invalid type!")
    N, C, H, W = pred.shape
    Ng, Cg, Hg, Wg = gt.shape
    assert (Ng, Hg, Wg) == (N, H, W) and Cg == C + 1 and C >= 1

    hw = H * W
    T = pl.cdiv(hw, _LANES)                 # 128-lane pixel rows per (n, channel)
    pad = T * _LANES - hw

    isz_p = jnp.dtype(pred.dtype).itemsize
    isz_g = jnp.dtype(gt.dtype).itemsize
    step = max(_sublane_step(pred.dtype), _sublane_step(gt.dtype))
    vmem_cap = _vmem_capacity_bytes()

    # ---- tile planning: largest pixel tile keeping 2 inputs x 2 buffers plus an
    # allowance for in-kernel temporaries inside ~3/4 of this chip's VMEM. ----
    budget = (3 * vmem_cap) // 4
    per_row = _LANES * (2 * (isz_p + isz_g) + 4 * _TMP_TILES_F32)
    cap_rows = min(budget // per_row, tile_bytes // (_LANES * max(isz_p, isz_g)))
    cap_rows = max(step, (cap_rows // step) * step)
    TT = T if T <= cap_rows else cap_rows
    num_tiles = pl.cdiv(T, TT)

    # ---- optional 2-way split of the pixel-tile range for dual-TensorCore chips ----
    ncores = 2 if _force_split else _num_tensorcores()
    nsplit = 1
    if num_tiles >= 2 and num_tiles % 2 == 0:
        nsplit = 2                                        # free on every chip
    elif ncores >= 2:
        if num_tiles == 1 and T >= 2 * step:
            TT = _round_up(pl.cdiv(T, 2), step)           # force two tiles
            num_tiles = pl.cdiv(T, TT)
        elif num_tiles > 1:
            lo = max(step, (TT // 2 // step) * step)
            for cand in range(TT, lo - 1, -step):
                if pl.cdiv(T, cand) % 2 == 0:             # even tile count: no dead tile
                    TT, num_tiles = cand, pl.cdiv(T, cand)
                    break
        nsplit = 2 if num_tiles >= 2 else 1
    tps = pl.cdiv(num_tiles, nsplit)                      # pixel tiles per split

    needs_clamp = nsplit * tps != num_tiles
    needs_mask = (pad != 0) or (num_tiles * TT != T) or needs_clamp

    # View-only reshapes; a zero pad (one copy) only when H*W % 128 != 0.
    pred_r = pred.reshape(N, C, hw)
    gt_r = gt.reshape(N, C + 1, hw)
    if pad:
        # TODO(synk): padding copies the tensors once; only hit when H*W % 128 != 0.
        pred_r = jnp.pad(pred_r, ((0, 0), (0, 0), (0, pad)))
        gt_r = jnp.pad(gt_r, ((0, 0), (0, 0), (0, pad)))
    pred_r = pred_r.reshape(N, C, T, _LANES)
    gt_r = gt_r.reshape(N, C + 1, T, _LANES)

    last_tile = num_tiles - 1
    if needs_clamp:
        def tile_of(s, t):
            return jnp.minimum(s * tps + t, last_tile)
    else:
        def tile_of(s, t):
            return s * tps + t

    est = _LANES * TT * (2 * (isz_p + isz_g) + 4 * _TMP_TILES_F32)
    vmem_limit = int(max(32 << 20, min((3 * vmem_cap) // 4, est + (16 << 20))))

    kernel = _make_stats_kernel(TT, tps, hw, needs_mask)
    stats = pl.pallas_call(
        kernel,
        out_shape=jax.ShapeDtypeStruct((nsplit, C, 8, _LANES), jnp.float32),
        grid_spec=pltpu.PrefetchScalarGridSpec(
            num_scalar_prefetch=0,
            grid=(nsplit, C, N, tps),
            in_specs=[
                pl.BlockSpec((None, None, TT, _LANES),
                             lambda s, c, n, t: (n, c, tile_of(s, t), 0)),
                # gt channel shift (index + 1) lives in the index_map -> no gt[:, 1:] copy.
                pl.BlockSpec((None, None, TT, _LANES),
                             lambda s, c, n, t: (n, c + 1, tile_of(s, t), 0)),
            ],
            out_specs=pl.BlockSpec((None, None, 8, _LANES),
                                   lambda s, c, n, t: (s, c, 0, 0)),
        ),
        compiler_params=pltpu.CompilerParams(
            dimension_semantics=("parallel", "parallel", "arbitrary", "arbitrary"),
            vmem_limit_bytes=vmem_limit),
    )(pred_r, gt_r)

    # ---- tiny epilogue: cross-split + cross-lane reductions and the scalar math ----
    s = jnp.sum(jnp.sum(stats, axis=0), axis=-1)          # (C, 8)
    s_sig, s_g, s_absd, s_t, s_abst, s_rng, s_abstd, fg_nd = [s[:, i] for i in range(8)]

    # positive (Tversky) branch -- linear in the global sums.
    tp = (s_sig + s_g - s_absd) * 0.5
    fp = s_sig - tp
    fn = s_g - tp
    pos_loss = 1.0 - (tp + SMOOTH) / (tp + fp + fn + SMOOTH)

    # signed fg/bg IoU branch, derived from the 8 streamed sums.
    s_absg = s_g + 2.0 * s_rng                            # sum(|g|)
    fg_ns = 0.5 * (s_abst + s_t + s_absg + s_g)
    bg_ns = 0.5 * (s_abst - s_t + s_absg - s_g)
    bg_nd = s_abstd - fg_nd                               # |relu(t)-relu(g)|+|relu(-t)-relu(-g)| = |t-g|
    fg_i, fg_u = fg_ns - fg_nd, fg_ns + fg_nd
    bg_i, bg_u = bg_ns - bg_nd, bg_ns + bg_nd
    if loss_type == 1:
        neg_loss = (1.0 - fg_i / (fg_u + SMOOTH)) + (1.0 - bg_i / (bg_u + SMOOTH))
    else:
        neg_loss = 1.0 - (fg_i + bg_i) / (fg_u + bg_u)

    per_ch = jnp.where(s_rng <= 0.0, pos_loss, neg_loss)  # sum(relu(-g)) == 0 <=> min(g) >= 0
    w = jnp.concatenate([jnp.ones((1,), jnp.float32),
                         jnp.full((C - 1,), secondary_weight, jnp.float32)])
    return jnp.sum(per_ch * w)


# ---------------- pure-JAX reference (mirrors the PyTorch module) ----------------
def _reference_loss(pred, gt, *, loss_type=1, secondary_weight=1.0):
    pred = pred.astype(jnp.float32)
    gt = gt.astype(jnp.float32)

    def loss_on_class(i):
        g = gt[:, i].reshape(gt.shape[0], -1)
        pr = pred[:, i - 1].reshape(pred.shape[0], -1)

        prob = jax.nn.sigmoid(pr)
        card = jnp.sum(prob + g, axis=1)
        diff = jnp.sum(jnp.abs(prob - g), axis=1)
        tp = (card - diff) / 2
        fp = jnp.sum(prob, axis=1) - tp
        fn = jnp.sum(g, axis=1) - tp
        tp, fp, fn = jnp.sum(tp), jnp.sum(fp), jnp.sum(fn)
        pos = 1.0 - (tp + SMOOTH) / (tp + fp + fn + SMOOTH)

        t = jnp.tanh(pr)

        def iou(x, y):
            ns = jnp.sum(jnp.abs(x + y))
            nd = jnp.sum(jnp.abs(x - y))
            return ns - nd, ns + nd

        fi, fu = iou(jnp.maximum(t, 0.0), jnp.maximum(g, 0.0))
        bi, bu = iou(jnp.maximum(-t, 0.0), jnp.maximum(-g, 0.0))
        if loss_type == 1:
            neg = (1.0 - fi / (fu + SMOOTH)) + (1.0 - bi / (bu + SMOOTH))
        else:
            neg = 1.0 - (fi + bi) / (fu + bu)
        return jnp.where(jnp.min(g) >= 0, pos, neg)

    loss = loss_on_class(1)
    for i in range(2, gt.shape[1]):
        loss = loss + loss_on_class(i) * secondary_weight
    return loss


if __name__ == "__main__":
    base = jax.random.PRNGKey(0)
    configs = [
        # (N, C, H, W, dtype, loss_type, secondary_weight, tile_bytes, force_split)
        (2, 4, 16, 16, jnp.float32, 1, 1.0, _TILE_BYTES, False),
        (2, 4, 16, 16, jnp.float32, 2, 0.5, _TILE_BYTES, False),
        # H*W % 128 != 0 -> wrapper zero-pad + in-kernel pixel mask
        (2, 3, 24, 24, jnp.float32, 1, 0.7, _TILE_BYTES, False),
        # tiny tile budget -> several tiles, odd count, forced 2-way core split,
        # dead-tile clamp + mask path
        (2, 2, 48, 48, jnp.float32, 2, 1.0, 4096, True),
        # bf16 streaming (kernel accumulates in f32), C == 1
        (2, 1, 64, 64, jnp.bfloat16, 1, 1.0, _TILE_BYTES, False),
    ]
    for idx, (N, C, H, W, dt, lt, sw, tb, fs) in enumerate(configs):
        k = jax.random.fold_in(base, idx)
        kp, kg, kpos = jax.random.split(k, 3)
        pred = jax.random.normal(kp, (N, C, H, W), jnp.float32)
        gt = jax.random.normal(kg, (N, C + 1, H, W), jnp.float32)
        # make one gt channel non-negative to exercise the sigmoid/Tversky branch
        gt = gt.at[:, min(2, C)].set(
            jnp.abs(jax.random.normal(kpos, (N, H, W), jnp.float32)))
        pred = pred.astype(dt)
        gt = gt.astype(dt)

        out = jax.block_until_ready(soft_jaccard_loss(
            pred, gt, loss_type=lt, secondary_weight=sw,
            tile_bytes=tb, _force_split=fs))
        ref = jax.block_until_ready(
            _reference_loss(pred, gt, loss_type=lt, secondary_weight=sw))
        assert np.allclose(np.asarray(out), np.asarray(ref),
                           rtol=1e-4, atol=1e-4), (idx, float(out), float(ref))

    print("KERNEL_OK")
</pallas_src>

<mosaic_0001>
module attributes {stable_mosaic.version = 11 : i64} {
  func.func @kernel(%arg0: i32, %arg1: i32, %arg2: i32, %arg3: i32, %arg4: memref<1x1x2x128xf32, #tpu.memory_space<vmem>>, %arg5: memref<1x1x2x128xf32, #tpu.memory_space<vmem>>, %arg6: memref<1x1x8x128xf32, #tpu.memory_space<vmem>>) attributes {dimension_semantics = [#tpu.dimension_semantics<parallel>, #tpu.dimension_semantics<parallel>, #tpu.dimension_semantics<arbitrary>, #tpu.dimension_semantics<arbitrary>], iteration_bounds = array<i64: 1, 4, 2, 1>, scalar_prefetch = 0 : i64, scratch_operands = 0 : i64, tpu.core_type = #tpu.core_type<tc>, window_params = [{transform_indices = @transform_0, window_bounds = array<i64: 1, 1, 2, 128>}, {transform_indices = @transform_1, window_bounds = array<i64: 1, 1, 2, 128>}, {transform_indices = @transform_2, window_bounds = array<i64: 1, 1, 8, 128>}]} {
    %c0_i32 = arith.constant 0 : i32
    %0 = arith.cmpi eq, %arg2, %c0_i32 : i32
    %c0_i32_0 = arith.constant 0 : i32
    %1 = arith.cmpi eq, %arg3, %c0_i32_0 : i32
    %2 = arith.andi %0, %1 : i1
    %3 = arith.extui %2 : i1 to i32
    %c0_i32_1 = arith.constant 0 : i32
    %4 = arith.cmpi ne, %3, %c0_i32_1 : i32
    scf.if %4 {
      %cst_78 = arith.constant 0.000000e+00 : f32
      %94 = vector.broadcast %cst_78 : f32 to vector<8x128xf32>
      %c0_79 = arith.constant 0 : index
      %c0_80 = arith.constant 0 : index
      %c0_81 = arith.constant 0 : index
      %c0_82 = arith.constant 0 : index
      %95 = vector.load %arg6[%c0_79, %c0_80, %c0_81, %c0_82] : memref<1x1x8x128xf32, #tpu.memory_space<vmem>>, vector<1x1x8x128xf32>
      %96 = vector.shape_cast %95 : vector<1x1x8x128xf32> to vector<8x128xf32>
      %97 = vector.shape_cast %94 : vector<8x128xf32> to vector<1x1x8x128xf32>
      tpu.vector_store %arg6[%c0_79, %c0_80, %c0_81, %c0_82], %97 {strides = array<i32>} : memref<1x1x8x128xf32, #tpu.memory_space<vmem>>, vector<1x1x8x128xf32>,
    } else {
    }
    %c0 = arith.constant 0 : index
    %c0_2 = arith.constant 0 : index
    %c0_3 = arith.constant 0 : index
    %c0_4 = arith.constant 0 : index
    %5 = vector.load %arg4[%c0, %c0_2, %c0_3, %c0_4] : memref<1x1x2x128xf32, #tpu.memory_space<vmem>>, vector<1x1x2x128xf32>
    %6 = vector.shape_cast %5 : vector<1x1x2x128xf32> to vector<2x128xf32>
    %c0_5 = arith.constant 0 : index
    %c0_6 = arith.constant 0 : index
    %c0_7 = arith.constant 0 : index
    %c0_8 = arith.constant 0 : index
    %7 = vector.load %arg5[%c0_5, %c0_6, %c0_7, %c0_8] : memref<1x1x2x128xf32, #tpu.memory_space<vmem>>, vector<1x1x2x128xf32>
    %8 = vector.shape_cast %7 : vector<1x1x2x128xf32> to vector<2x128xf32>
    %9 = arith.negf %6 : vector<2x128xf32>
    %10 = math.exp %9 : vector<2x128xf32>
    %cst = arith.constant 1.000000e+00 : f32
    %11 = vector.broadcast %cst : f32 to vector<2x128xf32>
    %12 = arith.addf %11, %10 : vector<2x128xf32>
    %13 = arith.divf %11, %12 : vector<2x128xf32>
    %14 = math.tanh %6 : vector<2x128xf32>
    %cst_9 = arith.constant 0.000000e+00 : f32
    %15 = vector.broadcast %cst_9 : f32 to vector<2x128xf32>
    %16 = arith.maximumf %14, %15 : vector<2x128xf32>
    %cst_10 = arith.constant 0.000000e+00 : f32
    %17 = vector.broadcast %cst_10 : f32 to vector<2x128xf32>
    %18 = arith.maximumf %8, %17 : vector<2x128xf32>
    %c0_11 = arith.constant 0 : index
    %c0_12 = arith.constant 0 : index
    %c0_13 = arith.constant 0 : index
    %c0_14 = arith.constant 0 : index
    %19 = vector.load %arg6[%c0_11, %c0_12, %c0_13, %c0_14] : memref<1x1x8x128xf32, #tpu.memory_space<vmem>>, vector<1x1x1x128xf32>
    %20 = vector.shape_cast %19 : vector<1x1x1x128xf32> to vector<1x128xf32>
    %cst_15 = arith.constant dense<0.000000e+00> : vector<128xf32>
    %21 = vector.multi_reduction <add>, %13, %cst_15 [0] : vector<2x128xf32> to vector<128xf32>
    %22 = vector.shape_cast %21 : vector<128xf32> to vector<1x128xf32>
    %23 = arith.addf %20, %22 : vector<1x128xf32>
    %c0_16 = arith.constant 0 : index
    %c0_17 = arith.constant 0 : index
    %c0_18 = arith.constant 0 : index
    %c0_19 = arith.constant 0 : index
    %24 = vector.load %arg6[%c0_16, %c0_17, %c0_18, %c0_19] : memref<1x1x8x128xf32, #tpu.memory_space<vmem>>, vector<1x1x1x128xf32>
    %25 = vector.shape_cast %24 : vector<1x1x1x128xf32> to vector<1x128xf32>
    %26 = vector.shape_cast %23 : vector<1x128xf32> to vector<1x1x1x128xf32>
    tpu.vector_store %arg6[%c0_16, %c0_17, %c0_18, %c0_19], %26 {strides = array<i32>} : memref<1x1x8x128xf32, #tpu.memory_space<vmem>>, vector<1x1x1x128xf32>,
    %c0_20 = arith.constant 0 : index
    %c0_21 = arith.constant 0 : index
    %c1 = arith.constant 1 : index
    %c0_22 = arith.constant 0 : index
    %27 = vector.load %arg6[%c0_20, %c0_21, %c1, %c0_22] : memref<1x1x8x128xf32, #tpu.memory_space<vmem>>, vector<1x1x1x128xf32>
    %28 = vector.shape_cast %27 : vector<1x1x1x128xf32> to vector<1x128xf32>
    %cst_23 = arith.constant dense<0.000000e+00> : vector<128xf32>
    %29 = vector.multi_reduction <add>, %8, %cst_23 [0] : vector<2x128xf32> to vector<128xf32>
    %30 = vector.shape_cast %29 : vector<128xf32> to vector<1x128xf32>
    %31 = arith.addf %28, %30 : vector<1x128xf32>
    %c0_24 = arith.constant 0 : index
    %c0_25 = arith.constant 0 : index
    %c1_26 = arith.constant 1 : index
    %c0_27 = arith.constant 0 : index
    %32 = vector.load %arg6[%c0_24, %c0_25, %c1_26, %c0_27] : memref<1x1x8x128xf32, #tpu.memory_space<vmem>>, vector<1x1x1x128xf32>
    %33 = vector.shape_cast %32 : vector<1x1x1x128xf32> to vector<1x128xf32>
    %34 = vector.shape_cast %31 : vector<1x128xf32> to vector<1x1x1x128xf32>
    tpu.vector_store %arg6[%c0_24, %c0_25, %c1_26, %c0_27], %34 {strides = array<i32>} : memref<1x1x8x128xf32, #tpu.memory_space<vmem>>, vector<1x1x1x128xf32>,
    %c0_28 = arith.constant 0 : index
    %c0_29 = arith.constant 0 : index
    %c2 = arith.constant 2 : index
    %c0_30 = arith.constant 0 : index
    %35 = vector.load %arg6[%c0_28, %c0_29, %c2, %c0_30] : memref<1x1x8x128xf32, #tpu.memory_space<vmem>>, vector<1x1x1x128xf32>
    %36 = vector.shape_cast %35 : vector<1x1x1x128xf32> to vector<1x128xf32>
    %37 = arith.subf %13, %8 : vector<2x128xf32>
    %38 = math.absf %37 : vector<2x128xf32>
    %cst_31 = arith.constant dense<0.000000e+00> : vector<128xf32>
    %39 = vector.multi_reduction <add>, %38, %cst_31 [0] : vector<2x128xf32> to vector<128xf32>
    %40 = vector.shape_cast %39 : vector<128xf32> to vector<1x128xf32>
    %41 = arith.addf %36, %40 : vector<1x128xf32>
    %c0_32 = arith.constant 0 : index
    %c0_33 = arith.constant 0 : index
    %c2_34 = arith.constant 2 : index
    %c0_35 = arith.constant 0 : index
    %42 = vector.load %arg6[%c0_32, %c0_33, %c2_34, %c0_35] : memref<1x1x8x128xf32, #tpu.memory_space<vmem>>, vector<1x1x1x128xf32>
    %43 = vector.shape_cast %42 : vector<1x1x1x128xf32> to vector<1x128xf32>
    %44 = vector.shape_cast %41 : vector<1x128xf32> to vector<1x1x1x128xf32>
    tpu.vector_store %arg6[%c0_32, %c0_33, %c2_34, %c0_35], %44 {strides = array<i32>} : memref<1x1x8x128xf32, #tpu.memory_space<vmem>>, vector<1x1x1x128xf32>,
    %c0_36 = arith.constant 0 : index
    %c0_37 = arith.constant 0 : index
    %c3 = arith.constant 3 : index
    %c0_38 = arith.constant 0 : index
    %45 = vector.load %arg6[%c0_36, %c0_37, %c3, %c0_38] : memref<1x1x8x128xf32, #tpu.memory_space<vmem>>, vector<1x1x1x128xf32>
    %46 = vector.shape_cast %45 : vector<1x1x1x128xf32> to vector<1x128xf32>
    %cst_39 = arith.constant dense<0.000000e+00> : vector<128xf32>
    %47 = vector.multi_reduction <add>, %14, %cst_39 [0] : vector<2x128xf32> to vector<128xf32>
    %48 = vector.shape_cast %47 : vector<128xf32> to vector<1x128xf32>
    %49 = arith.addf %46, %48 : vector<1x128xf32>
    %c0_40 = arith.constant 0 : index
    %c0_41 = arith.constant 0 : index
    %c3_42 = arith.constant 3 : index
    %c0_43 = arith.constant 0 : index
    %50 = vector.load %arg6[%c0_40, %c0_41, %c3_42, %c0_43] : memref<1x1x8x128xf32, #tpu.memory_space<vmem>>, vector<1x1x1x128xf32>
    %51 = vector.shape_cast %50 : vector<1x1x1x128xf32> to vector<1x128xf32>
    %52 = vector.shape_cast %49 : vector<1x128xf32> to vector<1x1x1x128xf32>
    tpu.vector_store %arg6[%c0_40, %c0_41, %c3_42, %c0_43], %52 {strides = array<i32>} : memref<1x1x8x128xf32, #tpu.memory_space<vmem>>, vector<1x1x1x128xf32>,
    %c0_44 = arith.constant 0 : index
    %c0_45 = arith.constant 0 : index
    %c4 = arith.constant 4 : index
    %c0_46 = arith.constant 0 : index
    %53 = vector.load %arg6[%c0_44, %c0_45, %c4, %c0_46] : memref<1x1x8x128xf32, #tpu.memory_space<vmem>>, vector<1x1x1x128xf32>
    %54 = vector.shape_cast %53 : vector<1x1x1x128xf32> to vector<1x128xf32>
    %55 = math.absf %14 : vector<2x128xf32>
    %cst_47 = arith.constant dense<0.000000e+00> : vector<128xf32>
    %56 = vector.multi_reduction <add>, %55, %cst_47 [0] : vector<2x128xf32> to vector<128xf32>
    %57 = vector.shape_cast %56 : vector<128xf32> to vector<1x128xf32>
    %58 = arith.addf %54, %57 : vector<1x128xf32>
    %c0_48 = arith.constant 0 : index
    %c0_49 = arith.constant 0 : index
    %c4_50 = arith.constant 4 : index
    %c0_51 = arith.constant 0 : index
    %59 = vector.load %arg6[%c0_48, %c0_49, %c4_50, %c0_51] : memref<1x1x8x128xf32, #tpu.memory_space<vmem>>, vector<1x1x1x128xf32>
    %60 = vector.shape_cast %59 : vector<1x1x1x128xf32> to vector<1x128xf32>
    %61 = vector.shape_cast %58 : vector<1x128xf32> to vector<1x1x1x128xf32>
    tpu.vector_store %arg6[%c0_48, %c0_49, %c4_50, %c0_51], %61 {strides = array<i32>} : memref<1x1x8x128xf32, #tpu.memory_space<vmem>>, vector<1x1x1x128xf32>,
    %c0_52 = arith.constant 0 : index
    %c0_53 = arith.constant 0 : index
    %c5 = arith.constant 5 : index
    %c0_54 = arith.constant 0 : index
    %62 = vector.load %arg6[%c0_52, %c0_53, %c5, %c0_54] : memref<1x1x8x128xf32, #tpu.memory_space<vmem>>, vector<1x1x1x128xf32>
    %63 = vector.shape_cast %62 : vector<1x1x1x128xf32> to vector<1x128xf32>
    %cst_55 = arith.constant 0.000000e+00 : f32
    %64 = vector.broadcast %cst_55 : f32 to vector<2x128xf32>
    %65 = arith.subf %64, %8 : vector<2x128xf32>
    %cst_56 = arith.constant 0.000000e+00 : f32
    %66 = vector.broadcast %cst_56 : f32 to vector<2x128xf32>
    %67 = arith.maximumf %65, %66 : vector<2x128xf32>
    %cst_57 = arith.constant dense<0.000000e+00> : vector<128xf32>
    %68 = vector.multi_reduction <add>, %67, %cst_57 [0] : vector<2x128xf32> to vector<128xf32>
    %69 = vector.shape_cast %68 : vector<128xf32> to vector<1x128xf32>
    %70 = arith.addf %63, %69 : vector<1x128xf32>
    %c0_58 = arith.constant 0 : index
    %c0_59 = arith.constant 0 : index
    %c5_60 = arith.constant 5 : index
    %c0_61 = arith.constant 0 : index
    %71 = vector.load %arg6[%c0_58, %c0_59, %c5_60, %c0_61] : memref<1x1x8x128xf32, #tpu.memory_space<vmem>>, vector<1x1x1x128xf32>
    %72 = vector.shape_cast %71 : vector<1x1x1x128xf32> to vector<1x128xf32>
    %73 = vector.shape_cast %70 : vector<1x128xf32> to vector<1x1x1x128xf32>
    tpu.vector_store %arg6[%c0_58, %c0_59, %c5_60, %c0_61], %73 {strides = array<i32>} : memref<1x1x8x128xf32, #tpu.memory_space<vmem>>, vector<1x1x1x128xf32>,
    %c0_62 = arith.constant 0 : index
    %c0_63 = arith.constant 0 : index
    %c6 = arith.constant 6 : index
    %c0_64 = arith.constant 0 : index
    %74 = vector.load %arg6[%c0_62, %c0_63, %c6, %c0_64] : memref<1x1x8x128xf32, #tpu.memory_space<vmem>>, vector<1x1x1x128xf32>
    %75 = vector.shape_cast %74 : vector<1x1x1x128xf32> to vector<1x128xf32>
    %76 = arith.subf %14, %8 : vector<2x128xf32>
    %77 = math.absf %76 : vector<2x128xf32>
    %cst_65 = arith.constant dense<0.000000e+00> : vector<128xf32>
    %78 = vector.multi_reduction <add>, %77, %cst_65 [0] : vector<2x128xf32> to vector<128xf32>
    %79 = vector.shape_cast %78 : vector<128xf32> to vector<1x128xf32>
    %80 = arith.addf %75, %79 : vector<1x128xf32>
    %c0_66 = arith.constant 0 : index
    %c0_67 = arith.constant 0 : index
    %c6_68 = arith.constant 6 : index
    %c0_69 = arith.constant 0 : index
    %81 = vector.load %arg6[%c0_66, %c0_67, %c6_68, %c0_69] : memref<1x1x8x128xf32, #tpu.memory_space<vmem>>, vector<1x1x1x128xf32>
    %82 = vector.shape_cast %81 : vector<1x1x1x128xf32> to vector<1x128xf32>
    %83 = vector.shape_cast %80 : vector<1x128xf32> to vector<1x1x1x128xf32>
    tpu.vector_store %arg6[%c0_66, %c0_67, %c6_68, %c0_69], %83 {strides = array<i32>} : memref<1x1x8x128xf32, #tpu.memory_space<vmem>>, vector<1x1x1x128xf32>,
    %c0_70 = arith.constant 0 : index
    %c0_71 = arith.constant 0 : index
    %c7 = arith.constant 7 : index
    %c0_72 = arith.constant 0 : index
    %84 = vector.load %arg6[%c0_70, %c0_71, %c7, %c0_72] : memref<1x1x8x128xf32, #tpu.memory_space<vmem>>, vector<1x1x1x128xf32>
    %85 = vector.shape_cast %84 : vector<1x1x1x128xf32> to vector<1x128xf32>
    %86 = arith.subf %16, %18 : vector<2x128xf32>
    %87 = math.absf %86 : vector<2x128xf32>
    %cst_73 = arith.constant dense<0.000000e+00> : vector<128xf32>
    %88 = vector.multi_reduction <add>, %87, %cst_73 [0] : vector<2x128xf32> to vector<128xf32>
    %89 = vector.shape_cast %88 : vector<128xf32> to vector<1x128xf32>
    %90 = arith.addf %85, %89 : vector<1x128xf32>
    %c0_74 = arith.constant 0 : index
    %c0_75 = arith.constant 0 : index
    %c7_76 = arith.constant 7 : index
    %c0_77 = arith.constant 0 : index
    %91 = vector.load %arg6[%c0_74, %c0_75, %c7_76, %c0_77] : memref<1x1x8x128xf32, #tpu.memory_space<vmem>>, vector<1x1x1x128xf32>
    %92 = vector.shape_cast %91 : vector<1x1x1x128xf32> to vector<1x128xf32>
    %93 = vector.shape_cast %90 : vector<1x128xf32> to vector<1x1x1x128xf32>
    tpu.vector_store %arg6[%c0_74, %c0_75, %c7_76, %c0_77], %93 {strides = array<i32>} : memref<1x1x8x128xf32, #tpu.memory_space<vmem>>, vector<1x1x1x128xf32>,
    return
  }
  func.func @transform_0(%arg0: i32, %arg1: i32, %arg2: i32, %arg3: i32) -> (i32, i32, i32, i32) {
    %c1_i32 = arith.constant 1 : i32
    %0 = arith.muli %arg0, %c1_i32 : i32
    %1 = arith.addi %0, %arg3 : i32
    %c0_i32 = arith.constant 0 : i32
    %c0_i32_0 = arith.constant 0 : i32
    return %arg2, %arg1, %1, %c0_i32 : i32, i32, i32, i32
  }
  func.func @transform_1(%arg0: i32, %arg1: i32, %arg2: i32, %arg3: i32) -> (i32, i32, i32, i32) {
    %c1_i32 = arith.constant 1 : i32
    %0 = arith.addi %arg1, %c1_i32 : i32
    %c1_i32_0 = arith.constant 1 : i32
    %1 = arith.muli %arg0, %c1_i32_0 : i32
    %2 = arith.addi %1, %arg3 : i32
    %c0_i32 = arith.constant 0 : i32
    %c0_i32_1 = arith.constant 0 : i32
    return %arg2, %0, %2, %c0_i32 : i32, i32, i32, i32
  }
  func.func @transform_2(%arg0: i32, %arg1: i32, %arg2: i32, %arg3: i32) -> (i32, i32, i32, i32) {
    %c0_i32 = arith.constant 0 : i32
    %c0_i32_0 = arith.constant 0 : i32
    %c0_i32_1 = arith.constant 0 : i32
    return %arg0, %arg1, %c0_i32, %c0_i32_0 : i32, i32, i32, i32
  }
}

</mosaic_0001>

<llo_original>
// kernel: tpu_custom_call.1
$region0: #{tpu_custom_call.1}
  #allocation0 [shape = 'u32[]', space=smem, size = 0x4, offset = 0x4, fixed_abs, tag = 'smem constant byte address 0x4 - core index']
  #allocation1 [shape = 'u32[144,128]{1,0:T(1,128)}', space=vmem, size = 0x12000, scoped, tag = 'internal scratch']
  %s0 = inlined_call_operand.hbm [shape: f32[2,4,2,128], index: 0, kind: input, shape index: {}]
  %s1 = inlined_call_operand.hbm [shape: f32[2,5,2,128], index: 1, kind: input, shape index: {}]
  %s2 = inlined_call_operand.hbm [shape: f32[1,4,8,128], index: 2, kind: output, shape index: {}]
  %s3 = sld [smem:[#allocation0]]
  $region53: #{tpu_custom_call.1} parent=0
    _
  %s5 = ssub.s32 1, %s3
  %s6 = scalar_select 0, %s5, %s3
  $region1: #{tpu_custom_call.1} parent=0
    #allocation2 [shape = 'u8[2048]{0}', space=vmem, size = 0x800, scoped, tag = 'input window, operand 0']
    #allocation3 [shape = 's32[2]{0}', space=sflag, size = 0x8, scoped, tag = 'scoped memory for tpu_custom_call.1']
    #allocation4 [shape = 's32[2]{0}', space=sflag, size = 0x8, scoped, tag = 'scoped memory for tpu_custom_call.1']
    #allocation5 [shape = 'u8[2048]{0}', space=vmem, size = 0x800, scoped, tag = 'input window, operand 1']
    #allocation6 [shape = 's32[2]{0}', space=sflag, size = 0x8, scoped, tag = 'scoped memory for tpu_custom_call.1']
    #allocation7 [shape = 'u8[8192]{0}', space=vmem, size = 0x2000, scoped, tag = 'output window, operand 0']
    %7 = vsyncpa [#allocation3], 0
    %s8 = scalar_lea.sflag [#allocation3], 1
    %9 = vsyncpa %s8, 0
    %10 = vsyncpa [#allocation6], 0
    %s11 = scalar_lea.sflag [#allocation6], 1
    %12 = vsyncpa %s11, 0
    %13 = vsyncpa [#allocation4], 0
    %s14 = scalar_lea.sflag [#allocation4], 1
    %15 = vsyncpa %s14, 0
    loop: start=0, step=1, limit=10
    $region2: #{tpu_custom_call.1} parent=1 // loop_pre_header
      _
    $region3: #{tpu_custom_call.1} parent=1 // loop_header
      %s17 = sphi 0, %s21
      %p18 = scmp.ge.s32.totalorder %s17, 10
      %s24 = sphi 0, %s50
      %s25 = sphi 0, %s46
      %s26 = sphi 0, %s42
      %s27 = sphi 0, %s38
      %s28 = sphi 0, %s24
      %s29 = sphi 0, %s25
      %s30 = sphi 0, %s26
      %s31 = sphi 0, %s27
      %s32 = sphi 0, %s28
      %s33 = sphi 0, %s29
      %s34 = sphi 0, %s30
      %s35 = sphi 0, %s31
      %s59 = sphi 0, %s61
      %s62 = sphi 0, %s59
      %s63 = sphi 0, %s62
      %s79 = sphi 0, %s63
      %s93 = sphi 0, %s95
      %s96 = sphi 0, %s93
      %s97 = sphi 0, %s96
      %s113 = sphi 0, %s97
      %s121 = sphi 0, %s123
      %s124 = sphi 0, %s121
      %s125 = sphi 0, %s124
      %s141 = sphi 0, %s125
    $region4: #{tpu_custom_call.1} parent=1 // loop_header_branch
      %20 = sbr.rel (%p18) target = $region8
    $region5: #{tpu_custom_call.1} parent=1 // loop_body
      %s22 = ssub.s32 %s17, 1
      %s23 = ssub.s32 %s17, 2
      %s36 = sadd.s32 1, %s27
      %p37 = scmp.ge.s32.totalorder %s36, 1
      %s38 = scalar_select %p37, 0, %s36
      %s39 = sadd.s32 1, %s26
      %s40 = scalar_select %p37, %s39, %s26
      %p41 = scmp.ge.s32.totalorder %s40, 2
      %s42 = scalar_select %p41, 0, %s40
      %s43 = sadd.s32 1, %s25
      %s44 = scalar_select %p41, %s43, %s25
      %p45 = scmp.ge.s32.totalorder %s44, 4
      %s46 = scalar_select %p45, 0, %s44
      %s47 = sadd.s32 1, %s24
      %s48 = scalar_select %p45, %s47, %s24
      %p49 = scmp.ge.s32.totalorder %s48, 1
      %s50 = scalar_select %p49, 0, %s48
      %s51 = sadd.s32 %s24, %s27
      %s52 = sadd.s32 %s50, %s38
      %s53 = ssub.s32 %s26, %s42
      %s54 = ssub.s32 %s25, %s46
      %s55 = sor.u32 %s53, %s54
      %s56 = ssub.s32 %s51, %s52
      %s57 = sor.u32 %s55, %s56
      %p58 = scmp.eq.s32.totalorder %s57, 0
      %s60 = sadd.s32 %s59, 1
      %s61 = scalar_select %p58, %s59, %s60
      %p64 = pneg %p58
      %p65 = scmp.eq.s32.totalorder %s17, 7
      %p66 = por %p64, %p65
      %p67 = scmp.ne.s32.totalorder %s59, %s62
      %p68 = scmp.eq.s32.totalorder %s17, 0
      %p69 = por %p67, %p68
      %p70 = scmp.ne.s32.totalorder %s59, %s62
      %p71 = scmp.eq.s32.totalorder %s22, 7
      %p72 = por %p70, %p71
      %p73 = scmp.ne.s32.totalorder %s62, %s63
      %p74 = scmp.eq.s32.totalorder %s22, 0
      %p75 = por %p73, %p74
      %p76 = scmp.ne.s32.totalorder %s62, %s63
      %p77 = scmp.eq.s32.totalorder %s23, 7
      %p78 = por %p76, %p77
      %p80 = scmp.ne.s32.totalorder %s63, %s79
      %p81 = scmp.eq.s32.totalorder %s23, 0
      %p82 = por %p80, %p81
      %s83 = sadd.s32 %s25, 1
      %s84 = sadd.s32 %s24, %s27
      %s85 = sadd.s32 %s46, 1
      %s86 = sadd.s32 %s50, %s38
      %s87 = ssub.s32 %s26, %s42
      %s88 = ssub.s32 %s83, %s85
      %s89 = sor.u32 %s87, %s88
      %s90 = ssub.s32 %s84, %s86
      %s91 = sor.u32 %s89, %s90
      %p92 = scmp.eq.s32.totalorder %s91, 0
      %s94 = sadd.s32 %s93, 1
      %s95 = scalar_select %p92, %s93, %s94
      %p98 = pneg %p92
      %p99 = scmp.eq.s32.totalorder %s17, 7
      %p100 = por %p98, %p99
      %p101 = scmp.ne.s32.totalorder %s93, %s96
      %p102 = scmp.eq.s32.totalorder %s17, 0
      %p103 = por %p101, %p102
      %p104 = scmp.ne.s32.totalorder %s93, %s96
      %p105 = scmp.eq.s32.totalorder %s22, 7
      %p106 = por %p104, %p105
      %p107 = scmp.ne.s32.totalorder %s96, %s97
      %p108 = scmp.eq.s32.totalorder %s22, 0
      %p109 = por %p107, %p108
      %p110 = scmp.ne.s32.totalorder %s96, %s97
      %p111 = scmp.eq.s32.totalorder %s23, 7
      %p112 = por %p110, %p111
      %p114 = scmp.ne.s32.totalorder %s97, %s113
      %p115 = scmp.eq.s32.totalorder %s23, 0
      %p116 = por %p114, %p115
      %s117 = ssub.s32 %s24, %s50
      %s118 = ssub.s32 %s25, %s46
      %s119 = sor.u32 %s117, %s118
      %p120 = scmp.eq.s32.totalorder %s119, 0
      %s122 = sadd.s32 %s121, 1
      %s123 = scalar_select %p120, %s121, %s122
      %p126 = pneg %p120
      %p127 = scmp.eq.s32.totalorder %s17, 7
      %p128 = por %p126, %p127
      %p129 = scmp.ne.s32.totalorder %s121, %s124
      %p130 = scmp.eq.s32.totalorder %s17, 0
      %p131 = por %p129, %p130
      %p132 = scmp.ne.s32.totalorder %s121, %s124
      %p133 = scmp.eq.s32.totalorder %s22, 7
      %p134 = por %p132, %p133
      %p135 = scmp.ne.s32.totalorder %s124, %s125
      %p136 = scmp.eq.s32.totalorder %s22, 0
      %p137 = por %p135, %p136
      %p138 = scmp.ne.s32.totalorder %s124, %s125
      %p139 = scmp.eq.s32.totalorder %s23, 7
      %p140 = por %p138, %p139
      %p142 = scmp.ne.s32.totalorder %s125, %s141
      %p143 = scmp.eq.s32.totalorder %s23, 0
      %p144 = por %p142, %p143
      %p145 = scmp.le.s32.totalorder 1, %s17
      %p146 = scmp.lt.s32.totalorder %s17, 9
      %p147 = pnand %p145, %p146
      %p148 = pneg %p147
      // Predicated region
      $region9: #{tpu_custom_call.1} parent=5 // pred_check
        _
      $region10: #{tpu_custom_call.1} parent=5 // pred_check_branch
        %150 = sbr.rel (%p147) target = $region12
      $region11: #{tpu_custom_call.1} parent=5 // pred_region
        %s151 = ssub.s32 %s17, 1
      $region12: #{tpu_custom_call.1} parent=5 // pred_fallthru
        _
      %p152 = scmp.lt.s32.totalorder %s17, 8
      // Predicated region
      $region13: #{tpu_custom_call.1} parent=5 // pred_check
        %p153 = pneg %p152
      $region14: #{tpu_custom_call.1} parent=5 // pred_check_branch
        %155 = sbr.rel (%p153) target = $region16
      $region15: #{tpu_custom_call.1} parent=5 // pred_region
        // Predicated region
        $region17: #{tpu_custom_call.1} parent=15 // pred_check
          %p156 = pneg %p69
        $region18: #{tpu_custom_call.1} parent=15 // pred_check_branch
          %158 = sbr.rel (%p156) target = $region20
        $region19: #{tpu_custom_call.1} parent=15 // pred_region
          %s159 = sand.u32 %s59, 1
          %s160 = scalar_lea.sflag [#allocation3], %s159
          %s161 = sand.u32 %s59, 1
          %s162 = smul.addr %s161, 2
          %s163 = scalar_lea.vmem [#allocation2], %s162
          %s164 = sadd.s32 %s24, %s27
          %s166 = ssub.s32 32, 32
          %167 = vsyncadd %s160, %s166
          %s168 = sadd.s32 %s164, %s25
          %s169 = smul.addr %s26, 4
          %s170 = sadd.s32 %s168, %s169
          %s171 = smul.addr %s170, 32
          %s172 = scalar_lea.hbm %s0, %s171
          %s174 = sshll.u32 %s163, 4
          %s175 = int_to_ptr.vmem [resolvable:$true] %s174
          %177 = dma.hbm_to_vmem [thread:$0]  %s172, 32, %s175, %s160
        $region20: #{tpu_custom_call.1} parent=15 // pred_fallthru
          _
        // Predicated region
        $region21: #{tpu_custom_call.1} parent=15 // pred_check
          %p178 = pneg %p103
        $region22: #{tpu_custom_call.1} parent=15 // pred_check_branch
          %180 = sbr.rel (%p178) target = $region24
        $region23: #{tpu_custom_call.1} parent=15 // pred_region
          %s181 = sand.u32 %s93, 1
          %s182 = scalar_lea.sflag [#allocation6], %s181
          %s183 = sand.u32 %s93, 1
          %s184 = smul.addr %s183, 2
          %s185 = scalar_lea.vmem [#allocation5], %s184
          %s186 = sadd.s32 %s25, 1
          %s187 = sadd.s32 %s24, %s27
          %s189 = ssub.s32 32, 32
          %190 = vsyncadd %s182, %s189
          %s191 = sadd.s32 %s187, %s186
          %s192 = smul.addr %s26, 5
          %s193 = sadd.s32 %s191, %s192
          %s194 = smul.addr %s193, 32
          %s195 = scalar_lea.hbm %s1, %s194
          %s197 = sshll.u32 %s185, 4
          %s198 = int_to_ptr.vmem [resolvable:$true] %s197
          %200 = dma.hbm_to_vmem [thread:$0]  %s195, 32, %s198, %s182
        $region24: #{tpu_custom_call.1} parent=15 // pred_fallthru
          _
      $region16: #{tpu_custom_call.1} parent=5 // pred_fallthru
        _
      %p201 = scmp.le.s32.totalorder 1, %s17
      %p202 = scmp.lt.s32.totalorder %s17, 9
      %p203 = pnand %p201, %p202
      %p204 = pneg %p203
      // Predicated region
      $region25: #{tpu_custom_call.1} parent=5 // pred_check
        _
      $region26: #{tpu_custom_call.1} parent=5 // pred_check_branch
        %206 = sbr.rel (%p203) target = $region28
      $region27: #{tpu_custom_call.1} parent=5 // pred_region
        %s207 = ssub.s32 %s17, 1
        %s208 = sand.u32 %s62, 1
        %s209 = scalar_lea.sflag [#allocation3], %s208
        %s210 = sand.u32 %s62, 1
        %s211 = smul.addr %s210, 2
        %s212 = scalar_lea.vmem [#allocation2], %s211
        // Predicated region
        $region29: #{tpu_custom_call.1} parent=27 // pred_check
          %p213 = pneg %p75
        $region30: #{tpu_custom_call.1} parent=27 // pred_check_branch
          %215 = sbr.rel (%p213) target = $region32
        $region31: #{tpu_custom_call.1} parent=27 // pred_region
          %216 = dma.done %s209, 32
        $region32: #{tpu_custom_call.1} parent=27 // pred_fallthru
          _
        %s217 = sand.u32 %s96, 1
        %s218 = scalar_lea.sflag [#allocation6], %s217
        %s219 = sand.u32 %s96, 1
        %s220 = smul.addr %s219, 2
        %s221 = scalar_lea.vmem [#allocation5], %s220
        // Predicated region
        $region33: #{tpu_custom_call.1} parent=27 // pred_check
          %p222 = pneg %p109
        $region34: #{tpu_custom_call.1} parent=27 // pred_check_branch
          %224 = sbr.rel (%p222) target = $region36
        $region35: #{tpu_custom_call.1} parent=27 // pred_region
          %225 = dma.done %s218, 32
        $region36: #{tpu_custom_call.1} parent=27 // pred_fallthru
          _
        %s226 = sand.u32 %s62, 1
        %s227 = scalar_lea.sflag [#allocation3], %s226
        %s228 = sand.u32 %s62, 1
        %s229 = smul.addr %s228, 2
        %s230 = scalar_lea.vmem [#allocation2], %s229
        %p231 = pneg %p75
        %p232 = pneg %p72
        %s233 = sand.u32 %s96, 1
        %s234 = scalar_lea.sflag [#allocation6], %s233
        %s235 = sand.u32 %s96, 1
        %s236 = smul.addr %s235, 2
        %s237 = scalar_lea.vmem [#allocation5], %s236
        %p238 = pneg %p109
        %p239 = pneg %p106
        %p240 = pneg %p137
        %p241 = pneg %p134
        %s242 = sand.u32 %s124, 1
        %s243 = scalar_lea.sflag [#allocation4], %s242
        %s244 = sand.u32 %s124, 1
        %s245 = smul.addr %s244, 8
        %s246 = scalar_lea.vmem [#allocation7], %s245
        %s247 = sadd.s32 %s28, %s31
        %s248 = sadd.s32 %s29, 1
        %s249 = sadd.s32 %s28, %s31
        %p250 = scmp.eq.s32.totalorder %s30, 0
        %p251 = scmp.eq.s32.totalorder %s31, 0
        %p252 = pnand %p250, %p251
        %p253 = pneg %p252
        // Predicated region
        $region37: #{tpu_custom_call.1} parent=27 // pred_check
          _
        $region38: #{tpu_custom_call.1} parent=27 // pred_check_branch
          %255 = sbr.rel (%p252) target = $region40
        $region39: #{tpu_custom_call.1} parent=27 // pred_region
          %256 = vst [vmem:[%s246] sm:$0xff] 0.0
        $region40: #{tpu_custom_call.1} parent=27 // pred_fallthru
          _
        %v257 = vld [vmem:[%s212] sm:$0x3]
        %v258 = vld [vmem:[%s221] sm:$0x3]
        %v259 = vxor.u32 %v257, 2147483648
        %v260 = vmul.f32 %v259, 1.442695
        %v261 = vpow.pop %v260
        %v262 = vadd.f32 %v261, 1.0
        %v263 = vrcp.pop %v262
        %v264 = vmul.f32 1.0, %v263
        %v265 = vtanh.pop %v257
        %v266 = vmax.f32 %v265, 0.0
        %v267 = vmax.f32 %v258, 0.0
        %v268 = vld [vmem:[%s246] sm:$0x1]
        %vm269 = vcmask 1041408
        %v270 = vsel %vm269, %v264, 0.0
        %v271 = vrot.slane %v270, 4
        %v272 = vadd.f32 %v270, %v271
        %v273 = vrot.slane %v272, 2
        %v274 = vadd.f32 %v272, %v273
        %v275 = vrot.slane %v274, 1
        %v276 = vadd.f32 %v274, %v275
        %v277 = vadd.f32 %v268, %v276
        %278 = vst [vmem:[%s246] sm:$0x1] %v277
        %v279 = vld [vmem:[%s246 + $0x1] sm:$0x1]
        %v280 = vsel %vm269, %v258, 0.0
        %v281 = vrot.slane %v280, 4
        %v282 = vadd.f32 %v280, %v281
        %v283 = vrot.slane %v282, 2
        %v284 = vadd.f32 %v282, %v283
        %v285 = vrot.slane %v284, 1
        %v286 = vadd.f32 %v284, %v285
        %v287 = vadd.f32 %v279, %v286
        %288 = vst [vmem:[%s246 + $0x1] sm:$0x1] %v287
        %v289 = vld [vmem:[%s246 + $0x2] sm:$0x1]
        %v290 = vsub.f32 %v264, %v258
        %v291 = vand.u32 2147483647, %v290
        %v292 = vsel %vm269, %v291, 0.0
        %v293 = vrot.slane %v292, 4
        %v294 = vadd.f32 %v292, %v293
        %v295 = vrot.slane %v294, 2
        %v296 = vadd.f32 %v294, %v295
        %v297 = vrot.slane %v296, 1
        %v298 = vadd.f32 %v296, %v297
        %v299 = vadd.f32 %v289, %v298
        %300 = vst [vmem:[%s246 + $0x2] sm:$0x1] %v299
        %v301 = vld [vmem:[%s246 + $0x3] sm:$0x1]
        %v302 = vsel %vm269, %v265, 0.0
        %v303 = vrot.slane %v302, 4
        %v304 = vadd.f32 %v302, %v303
        %v305 = vrot.slane %v304, 2
        %v306 = vadd.f32 %v304, %v305
        %v307 = vrot.slane %v306, 1
        %v308 = vadd.f32 %v306, %v307
        %v309 = vadd.f32 %v301, %v308
        %310 = vst [vmem:[%s246 + $0x3] sm:$0x1] %v309
        %v311 = vld [vmem:[%s246 + $0x4] sm:$0x1]
        %v312 = vand.u32 2147483647, %v265
        %v313 = vsel %vm269, %v312, 0.0
        %v314 = vrot.slane %v313, 4
        %v315 = vadd.f32 %v313, %v314
        %v316 = vrot.slane %v315, 2
        %v317 = vadd.f32 %v315, %v316
        %v318 = vrot.slane %v317, 1
        %v319 = vadd.f32 %v317, %v318
        %v320 = vadd.f32 %v311, %v319
        %321 = vst [vmem:[%s246 + $0x4] sm:$0x1] %v320
        %v322 = vld [vmem:[%s246 + $0x5] sm:$0x1]
        %v323 = vsub.f32 0.0, %v258
        %v324 = vmax.f32 %v323, 0.0
        %v325 = vsel %vm269, %v324, 0.0
        %v326 = vrot.slane %v325, 4
        %v327 = vadd.f32 %v325, %v326
        %v328 = vrot.slane %v327, 2
        %v329 = vadd.f32 %v327, %v328
        %v330 = vrot.slane %v329, 1
        %v331 = vadd.f32 %v329, %v330
        %v332 = vadd.f32 %v322, %v331
        %333 = vst [vmem:[%s246 + $0x5] sm:$0x1] %v332
        %v334 = vld [vmem:[%s246 + $0x6] sm:$0x1]
        %v335 = vsub.f32 %v265, %v258
        %v336 = vand.u32 2147483647, %v335
        %v337 = vsel %vm269, %v336, 0.0
        %v338 = vrot.slane %v337, 4
        %v339 = vadd.f32 %v337, %v338
        %v340 = vrot.slane %v339, 2
        %v341 = vadd.f32 %v339, %v340
        %v342 = vrot.slane %v341, 1
        %v343 = vadd.f32 %v341, %v342
        %v344 = vadd.f32 %v334, %v343
        %345 = vst [vmem:[%s246 + $0x6] sm:$0x1] %v344
        %v346 = vld [vmem:[%s246 + $0x7] sm:$0x1]
        %v347 = vsub.f32 %v266, %v267
        %v348 = vand.u32 2147483647, %v347
        %v349 = vsel %vm269, %v348, 0.0
        %v350 = vrot.slane %v349, 4
        %v351 = vadd.f32 %v349, %v350
        %v352 = vrot.slane %v351, 2
        %v353 = vadd.f32 %v351, %v352
        %v354 = vrot.slane %v353, 1
        %v355 = vadd.f32 %v353, %v354
        %v356 = vadd.f32 %v346, %v355
        %357 = vst [vmem:[%s246 + $0x7] sm:$0x1] %v356
        %s358 = sand.u32 %s124, 1
        %s359 = scalar_lea.sflag [#allocation4], %s358
        %s360 = sand.u32 %s124, 1
        %s361 = smul.addr %s360, 8
        %s362 = scalar_lea.vmem [#allocation7], %s361
        // Predicated region
        $region41: #{tpu_custom_call.1} parent=27 // pred_check
          %p363 = pneg %p134
        $region42: #{tpu_custom_call.1} parent=27 // pred_check_branch
          %365 = sbr.rel (%p363) target = $region44
        $region43: #{tpu_custom_call.1} parent=27 // pred_region
          %s367 = ssub.s32 128, 128
          %368 = vsyncadd %s359, %s367
          %s369 = smul.addr %s28, 4
          %s370 = sadd.s32 %s29, %s369
          %s371 = smul.addr %s370, 128
          %s372 = scalar_lea.hbm %s2, %s371
          %s374 = sshll.u32 %s362, 4
          %s375 = int_to_ptr.vmem [resolvable:$true] %s374
          %377 = dma.vmem_to_hbm [thread:$0]  %s375, 128, %s372, %s359
        $region44: #{tpu_custom_call.1} parent=27 // pred_fallthru
          _
      $region28: #{tpu_custom_call.1} parent=5 // pred_fallthru
        _
      %p378 = scmp.le.s32.totalorder 2, %s17
      // Predicated region
      $region45: #{tpu_custom_call.1} parent=5 // pred_check
        %p379 = pneg %p378
      $region46: #{tpu_custom_call.1} parent=5 // pred_check_branch
        %381 = sbr.rel (%p379) target = $region48
      $region47: #{tpu_custom_call.1} parent=5 // pred_region
        %s382 = ssub.s32 %s17, 2
        // Predicated region
        $region49: #{tpu_custom_call.1} parent=47 // pred_check
          %p383 = pneg %p140
        $region50: #{tpu_custom_call.1} parent=47 // pred_check_branch
          %385 = sbr.rel (%p383) target = $region52
        $region51: #{tpu_custom_call.1} parent=47 // pred_region
          %s386 = sand.u32 %s125, 1
          %s387 = scalar_lea.sflag [#allocation4], %s386
          %s388 = sand.u32 %s125, 1
          %s389 = smul.addr %s388, 8
          %s390 = scalar_lea.vmem [#allocation7], %s389
          %391 = dma.done %s387, 128
        $region52: #{tpu_custom_call.1} parent=47 // pred_fallthru
          _
      $region48: #{tpu_custom_call.1} parent=5 // pred_fallthru
        _
    $region6: #{tpu_custom_call.1} parent=1 // loop_footer
      %s21 = sadd.s32 1, %s17
    $region7: #{tpu_custom_call.1} parent=1 // loop_footer_branch
      %16 = sbr.rel target = $region3
    $region8: #{tpu_custom_call.1} parent=1 // loop_exit
      _
    %392 = vsyncpa [#allocation3], 1
    %s393 = scalar_lea.sflag [#allocation3], 1
    %394 = vsyncpa %s393, 1
    %395 = vsyncpa [#allocation6], 1
    %s396 = scalar_lea.sflag [#allocation6], 1
    %397 = vsyncpa %s396, 1
    %398 = vsyncpa [#allocation4], 1
    %s399 = scalar_lea.sflag [#allocation4], 1
    %400 = vsyncpa %s399, 1

</llo_original>
